<compile_context>
chip_gen: v7x
topology: tpu7x:2x2x1
jax: 0.10.0
libtpu: 0.0.40
codegen_flags: <defaults>
</compile_context>

<pallas_src>
import jax
import jax.numpy as jnp
from jax.experimental import pallas as pl
from jax.experimental.pallas import tpu as pltpu


def adv_net_kernel(x_ref, w1_ref, b1_ref, w2_ref, b2_ref, w3_ref, b3_ref, y_ref):
    x = x_ref[...]                                                 # (TB, F) bf16
    # ad_layer1 (MXU, bf16 in / f32 acc) + relu1  (dropout1 = identity in eval)
    h1 = jnp.dot(x, w1_ref[...], preferred_element_type=jnp.float32)
    h1 = jnp.maximum(h1 + b1_ref[...], 0.0)                        # f32 elementwise
    # ad_layer2 (MXU, bf16 in / f32 acc) + relu2  (dropout2 = identity in eval)
    h2 = jnp.dot(h1.astype(jnp.bfloat16), w2_ref[...],
                 preferred_element_type=jnp.float32)
    h2 = jnp.maximum(h2 + b2_ref[...], 0.0)                        # f32 elementwise
    # ad_layer3: output width 1 -> keep off the MXU; VPU multiply + XLU lane reduce.
    logits = jnp.sum(h2 * w3_ref[...], axis=-1, keepdims=True) + b3_ref[0, 0]
    # sigmoid via EUP exp + approximate reciprocal (EUP slot, essentially free).
    y = pl.reciprocal(1.0 + jnp.exp(-logits), approx=True)
    y_ref[...] = y.astype(y_ref.dtype)


def adversarial_network_forward(x, params, tile_b=256):
    """x: [B, F] float32. params: w1[F,H], b1[1,H], w2[H,H], b2[1,H], w3[1,H], b3[1,1]."""
    B, F = x.shape
    H = params["w1"].shape[1]

    # Batch tile: multiple of 8 (sublane) or the full batch.
    if B <= tile_b:
        TB = B
    else:
        assert tile_b % 8 == 0, "tile_b must be a multiple of 8"
        TB = tile_b
    num_tiles = pl.cdiv(B, TB)
    B_pad = num_tiles * TB
    if B_pad != B:
        x = jnp.pad(x, ((0, B_pad - B), (0, 0)))

    # bf16 for MXU operands (halves HBM traffic for x and the big weights);
    # biases / w3 / all elementwise math stay f32.
    x_bf = x.astype(jnp.bfloat16)
    w1 = params["w1"].astype(jnp.bfloat16)
    w2 = params["w2"].astype(jnp.bfloat16)
    b1 = params["b1"].astype(jnp.float32)
    b2 = params["b2"].astype(jnp.float32)
    w3 = params["w3"].astype(jnp.float32)
    b3 = params["b3"].astype(jnp.float32)

    y = pl.pallas_call(
        adv_net_kernel,
        out_shape=jax.ShapeDtypeStruct((B_pad, 1), jnp.float32),
        grid=(num_tiles,),
        in_specs=[
            pl.BlockSpec((TB, F), lambda i: (i, 0)),   # x tile (pipelined over grid)
            pl.BlockSpec((F, H), lambda i: (0, 0)),    # w1 (resident)
            pl.BlockSpec((1, H), lambda i: (0, 0)),    # b1
            pl.BlockSpec((H, H), lambda i: (0, 0)),    # w2 (resident)
            pl.BlockSpec((1, H), lambda i: (0, 0)),    # b2
            pl.BlockSpec((1, H), lambda i: (0, 0)),    # w3 row
            pl.BlockSpec((1, 1), lambda i: (0, 0),     # b3 scalar in SMEM
                         memory_space=pltpu.MemorySpace.SMEM),
        ],
        out_specs=pl.BlockSpec((TB, 1), lambda i: (i, 0)),
        compiler_params=pltpu.CompilerParams(
            dimension_semantics=("parallel",),
            vmem_limit_bytes=48 * 1024 * 1024,
        ),
    )(x_bf, w1, b1, w2, b2, w3, b3)

    return y[:B]


def xavier_normal(key, fan_in, fan_out, shape):
    # matches nn.init.xavier_normal_ std = sqrt(2 / (fan_in + fan_out))
    std = (2.0 / (fan_in + fan_out)) ** 0.5
    return std * jax.random.normal(key, shape, dtype=jnp.float32)


def init_params(key, in_feature, hidden_size):
    k1, k2, k3 = jax.random.split(key, 3)
    return {
        # stored as [in, out] (transposed from PyTorch's [out, in])
        "w1": xavier_normal(k1, in_feature, hidden_size, (in_feature, hidden_size)),
        "b1": jnp.zeros((1, hidden_size), jnp.float32),
        "w2": xavier_normal(k2, hidden_size, hidden_size, (hidden_size, hidden_size)),
        "b2": jnp.zeros((1, hidden_size), jnp.float32),
        # layer-3 weight kept as a [1, H] row (PyTorch native layout) for the VPU reduction
        "w3": xavier_normal(k3, hidden_size, 1, (1, hidden_size)),
        "b3": jnp.zeros((1, 1), jnp.float32),
    }


def reference_forward(x, p):
    # Mirrors the kernel's numerics (bf16 MXU operands, f32 accumulation/elementwise).
    xb = x.astype(jnp.bfloat16)
    w1 = p["w1"].astype(jnp.bfloat16)
    w2 = p["w2"].astype(jnp.bfloat16)
    h1 = jnp.maximum(jnp.dot(xb, w1, preferred_element_type=jnp.float32) + p["b1"], 0.0)
    h2 = jnp.maximum(
        jnp.dot(h1.astype(jnp.bfloat16), w2, preferred_element_type=jnp.float32) + p["b2"], 0.0
    )
    logits = jnp.sum(h2 * p["w3"], axis=-1, keepdims=True) + p["b3"]
    return jax.nn.sigmoid(logits)


if __name__ == "__main__":
    key = jax.random.PRNGKey(0)
    kx, kp = jax.random.split(key)

    # Small shapes; tile_b=8 forces a multi-step grid (and exercises batch padding 12 -> 16).
    B, in_feature, hidden_size = 12, 64, 32
    x = jax.random.normal(kx, (B, in_feature), dtype=jnp.float32)
    params = init_params(kp, in_feature, hidden_size)

    y = adversarial_network_forward(x, params, tile_b=8)
    y = jax.block_until_ready(y)

    y_ref = reference_forward(x, params)
    assert y.shape == (B, 1), f"bad shape {y.shape}"
    assert jnp.allclose(y, y_ref, atol=2e-3, rtol=2e-3), "mismatch vs reference"

    print("KERNEL_OK")
</pallas_src>

<mosaic_0001>
module attributes {stable_mosaic.version = 11 : i64} {
  func.func @adv_net_kernel(%arg0: i32, %arg1: memref<8x64xbf16, #tpu.memory_space<vmem>>, %arg2: memref<64x32xbf16, #tpu.memory_space<vmem>>, %arg3: memref<1x32xf32, #tpu.memory_space<vmem>>, %arg4: memref<32x32xbf16, #tpu.memory_space<vmem>>, %arg5: memref<1x32xf32, #tpu.memory_space<vmem>>, %arg6: memref<1x32xf32, #tpu.memory_space<vmem>>, %arg7: memref<1x1xf32, #tpu.memory_space<smem>>, %arg8: memref<8x1xf32, #tpu.memory_space<vmem>>) attributes {dimension_semantics = [#tpu.dimension_semantics<parallel>], iteration_bounds = array<i64: 2>, scalar_prefetch = 0 : i64, scratch_operands = 0 : i64, tpu.core_type = #tpu.core_type<tc>, window_params = [{transform_indices = @transform_0, window_bounds = array<i64: 8, 64>}, {pipeline_mode = #tpu.pipeline_mode<synchronous>, transform_indices = @transform_1, window_bounds = array<i64: 64, 32>}, {pipeline_mode = #tpu.pipeline_mode<synchronous>, transform_indices = @transform_2, window_bounds = array<i64: 1, 32>}, {pipeline_mode = #tpu.pipeline_mode<synchronous>, transform_indices = @transform_3, window_bounds = array<i64: 32, 32>}, {pipeline_mode = #tpu.pipeline_mode<synchronous>, transform_indices = @transform_4, window_bounds = array<i64: 1, 32>}, {pipeline_mode = #tpu.pipeline_mode<synchronous>, transform_indices = @transform_5, window_bounds = array<i64: 1, 32>}, {transform_indices = @transform_6, window_bounds = array<i64: 1, 1>}, {transform_indices = @transform_7, window_bounds = array<i64: 8, 1>}]} {
    %c0 = arith.constant 0 : index
    %c0_0 = arith.constant 0 : index
    %0 = vector.load %arg1[%c0, %c0_0] : memref<8x64xbf16, #tpu.memory_space<vmem>>, vector<8x64xbf16>
    %c0_1 = arith.constant 0 : index
    %c0_2 = arith.constant 0 : index
    %1 = vector.load %arg2[%c0_1, %c0_2] : memref<64x32xbf16, #tpu.memory_space<vmem>>, vector<64x32xbf16>
    %cst = arith.constant dense<0.000000e+00> : vector<8x32xf32>
    %2 = tpu.matmul %0, %1, %cst {dimension_numbers = #tpu.dot_dimension_numbers<[1], [0], [0], [1], [0, 0, 1, 1], [], []>} : vector<8x64xbf16>, vector<64x32xbf16>, vector<8x32xf32> -> vector<8x32xf32>
    %c0_3 = arith.constant 0 : index
    %c0_4 = arith.constant 0 : index
    %3 = vector.load %arg3[%c0_3, %c0_4] : memref<1x32xf32, #tpu.memory_space<vmem>>, vector<1x32xf32>
    %4 = vector.broadcast %3 : vector<1x32xf32> to vector<8x32xf32>
    %5 = arith.addf %2, %4 : vector<8x32xf32>
    %cst_5 = arith.constant 0.000000e+00 : f32
    %6 = vector.broadcast %cst_5 : f32 to vector<8x32xf32>
    %7 = arith.maximumf %5, %6 : vector<8x32xf32>
    %8 = arith.truncf %7 : vector<8x32xf32> to vector<8x32xbf16>
    %c0_6 = arith.constant 0 : index
    %c0_7 = arith.constant 0 : index
    %9 = vector.load %arg4[%c0_6, %c0_7] : memref<32x32xbf16, #tpu.memory_space<vmem>>, vector<32x32xbf16>
    %cst_8 = arith.constant dense<0.000000e+00> : vector<8x32xf32>
    %10 = tpu.matmul %8, %9, %cst_8 {dimension_numbers = #tpu.dot_dimension_numbers<[1], [0], [0], [1], [0, 0, 1, 1], [], []>} : vector<8x32xbf16>, vector<32x32xbf16>, vector<8x32xf32> -> vector<8x32xf32>
    %c0_9 = arith.constant 0 : index
    %c0_10 = arith.constant 0 : index
    %11 = vector.load %arg5[%c0_9, %c0_10] : memref<1x32xf32, #tpu.memory_space<vmem>>, vector<1x32xf32>
    %12 = vector.broadcast %11 : vector<1x32xf32> to vector<8x32xf32>
    %13 = arith.addf %10, %12 : vector<8x32xf32>
    %cst_11 = arith.constant 0.000000e+00 : f32
    %14 = vector.broadcast %cst_11 : f32 to vector<8x32xf32>
    %15 = arith.maximumf %13, %14 : vector<8x32xf32>
    %c0_12 = arith.constant 0 : index
    %c0_13 = arith.constant 0 : index
    %16 = vector.load %arg6[%c0_12, %c0_13] : memref<1x32xf32, #tpu.memory_space<vmem>>, vector<1x32xf32>
    %17 = vector.broadcast %16 : vector<1x32xf32> to vector<8x32xf32>
    %18 = arith.mulf %15, %17 : vector<8x32xf32>
    %cst_14 = arith.constant dense<0.000000e+00> : vector<8xf32>
    %19 = vector.multi_reduction <add>, %18, %cst_14 [1] : vector<8x32xf32> to vector<8xf32>
    %20 = vector.shape_cast %19 : vector<8xf32> to vector<8x1xf32>
    %c0_15 = arith.constant 0 : index
    %c0_16 = arith.constant 0 : index
    %21 = memref.load %arg7[%c0_15, %c0_16] : memref<1x1xf32, #tpu.memory_space<smem>>
    %22 = vector.broadcast %21 : f32 to vector<8x1xf32>
    %23 = arith.addf %20, %22 : vector<8x1xf32>
    %cst_17 = arith.constant 0.000000e+00 : f32
    %24 = vector.broadcast %cst_17 : f32 to vector<8x1xf32>
    %25 = arith.subf %24, %23 : vector<8x1xf32>
    %26 = math.exp %25 : vector<8x1xf32>
    %cst_18 = arith.constant 1.000000e+00 : f32
    %27 = vector.broadcast %cst_18 : f32 to vector<8x1xf32>
    %28 = arith.addf %27, %26 : vector<8x1xf32>
    %29 = tpu.reciprocal %28 {approx = true} : vector<8x1xf32> -> vector<8x1xf32>
    %c0_19 = arith.constant 0 : index
    %c0_20 = arith.constant 0 : index
    %30 = vector.load %arg8[%c0_19, %c0_20] : memref<8x1xf32, #tpu.memory_space<vmem>>, vector<8x1xf32>
    tpu.vector_store %arg8[%c0_19, %c0_20], %29 {strides = array<i32>} : memref<8x1xf32, #tpu.memory_space<vmem>>, vector<8x1xf32>,
    return
  }
  func.func @transform_0(%arg0: i32) -> (i32, i32) {
    %c0_i32 = arith.constant 0 : i32
    %c0_i32_0 = arith.constant 0 : i32
    return %arg0, %c0_i32 : i32, i32
  }
  func.func @transform_1(%arg0: i32) -> (i32, i32) {
    %c0_i32 = arith.constant 0 : i32
    %c0_i32_0 = arith.constant 0 : i32
    %c0_i32_1 = arith.constant 0 : i32
    return %c0_i32, %c0_i32_0 : i32, i32
  }
  func.func @transform_2(%arg0: i32) -> (i32, i32) {
    %c0_i32 = arith.constant 0 : i32
    %c0_i32_0 = arith.constant 0 : i32
    %c0_i32_1 = arith.constant 0 : i32
    return %c0_i32, %c0_i32_0 : i32, i32
  }
  func.func @transform_3(%arg0: i32) -> (i32, i32) {
    %c0_i32 = arith.constant 0 : i32
    %c0_i32_0 = arith.constant 0 : i32
    %c0_i32_1 = arith.constant 0 : i32
    return %c0_i32, %c0_i32_0 : i32, i32
  }
  func.func @transform_4(%arg0: i32) -> (i32, i32) {
    %c0_i32 = arith.constant 0 : i32
    %c0_i32_0 = arith.constant 0 : i32
    %c0_i32_1 = arith.constant 0 : i32
    return %c0_i32, %c0_i32_0 : i32, i32
  }
  func.func @transform_5(%arg0: i32) -> (i32, i32) {
    %c0_i32 = arith.constant 0 : i32
    %c0_i32_0 = arith.constant 0 : i32
    %c0_i32_1 = arith.constant 0 : i32
    return %c0_i32, %c0_i32_0 : i32, i32
  }
  func.func @transform_6(%arg0: i32) -> (i32, i32) {
    %c0_i32 = arith.constant 0 : i32
    %c0_i32_0 = arith.constant 0 : i32
    %c0_i32_1 = arith.constant 0 : i32
    return %c0_i32, %c0_i32_0 : i32, i32
  }
  func.func @transform_7(%arg0: i32) -> (i32, i32) {
    %c0_i32 = arith.constant 0 : i32
    %c0_i32_0 = arith.constant 0 : i32
    return %arg0, %c0_i32 : i32, i32
  }
}

</mosaic_0001>

<llo_original>
// kernel: tpu_custom_call.1
$region0: #{tpu_custom_call.1}
  #allocation0 [shape = 'u32[]', space=smem, size = 0x4, offset = 0x4, fixed_abs, tag = 'smem constant byte address 0x4 - core index']
  #allocation1 [shape = 'u32[144,128]{1,0:T(1,128)}', space=vmem, size = 0x12000, scoped, tag = 'internal scratch']
  #allocation2 [shape = 'f32[1,1]{1,0:T(1,128)S(6)}', space=smem, size = 0x200, scoped, tag = 'scoped memory for tpu_custom_call.1']
  %s0 = inlined_call_operand.vmem [shape: bf16[16,64], index: 0, kind: input, shape index: {}]
  %s1 = inlined_call_operand.vmem [shape: bf16[64,32], index: 1, kind: input, shape index: {}]
  %s2 = inlined_call_operand.vmem [shape: f32[1,32], index: 2, kind: input, shape index: {}]
  %s3 = inlined_call_operand.vmem [shape: bf16[32,32], index: 3, kind: input, shape index: {}]
  %s4 = inlined_call_operand.vmem [shape: f32[1,32], index: 4, kind: input, shape index: {}]
  %s5 = inlined_call_operand.vmem [shape: f32[1,32], index: 5, kind: input, shape index: {}]
  %s6 = inlined_call_operand.<no memory space> [shape: f32[1,1], index: 6, kind: input, shape index: {}]
  %s7 = inlined_call_operand.vmem [shape: f32[16,1], index: 7, kind: output, shape index: {}]
  %s8 = sld [smem:[#allocation0]]
  $region61: #{tpu_custom_call.1} parent=0
    _
  %s10 = ssub.s32 1, %s8
  %s11 = scalar_select 0, %s10, %s8
  %12 = sst [smem:[#allocation2]] %s6
  loop: start=0, step=1, limit=4
  $region2: #{tpu_custom_call.1} parent=0 // loop_pre_header
    _
  $region3: #{tpu_custom_call.1} parent=0 // loop_header
    %s14 = sphi 0, %s18
    %p15 = scmp.ge.s32.totalorder %s14, 4
    %s24 = sphi 0, %s26
    %s27 = sphi 0, %s24
    %s28 = sphi 0, %s27
    %s44 = sphi 0, %s28
    %s48 = sphi 0, %s48
    %s50 = sphi 0, %s48
    %s51 = sphi 0, %s50
    %s65 = sphi 0, %s51
    %s69 = sphi 0, %s69
    %s71 = sphi 0, %s69
    %s72 = sphi 0, %s71
    %s86 = sphi 0, %s72
    %s90 = sphi 0, %s90
    %s92 = sphi 0, %s90
    %s93 = sphi 0, %s92
    %s107 = sphi 0, %s93
    %s111 = sphi 0, %s111
    %s113 = sphi 0, %s111
    %s114 = sphi 0, %s113
    %s128 = sphi 0, %s114
    %s132 = sphi 0, %s132
    %s134 = sphi 0, %s132
    %s135 = sphi 0, %s134
    %s149 = sphi 0, %s135
    %s153 = sphi 0, %s153
    %s155 = sphi 0, %s153
    %s156 = sphi 0, %s155
    %s170 = sphi 0, %s156
    %s176 = sphi 0, %s178
    %s179 = sphi 0, %s176
    %s180 = sphi 0, %s179
    %s196 = sphi 0, %s180
  $region4: #{tpu_custom_call.1} parent=0 // loop_header_branch
    %17 = sbr.rel (%p15) target = $region8
  $region5: #{tpu_custom_call.1} parent=0 // loop_body
    %s19 = ssub.s32 %s14, 1
    %s20 = ssub.s32 %s14, 2
    %s21 = sadd.s32 %s14, 1
    %s22 = ssub.s32 %s14, %s21
    %p23 = scmp.eq.s32.totalorder %s22, 0
    %s25 = sadd.s32 %s24, 1
    %s26 = scalar_select %p23, %s24, %s25
    %p29 = pneg %p23
    %p30 = scmp.eq.s32.totalorder %s14, 1
    %p31 = por %p29, %p30
    %p32 = scmp.ne.s32.totalorder %s24, %s27
    %p33 = scmp.eq.s32.totalorder %s14, 0
    %p34 = por %p32, %p33
    %p35 = scmp.ne.s32.totalorder %s24, %s27
    %p36 = scmp.eq.s32.totalorder %s19, 1
    %p37 = por %p35, %p36
    %p38 = scmp.ne.s32.totalorder %s27, %s28
    %p39 = scmp.eq.s32.totalorder %s19, 0
    %p40 = por %p38, %p39
    %p41 = scmp.ne.s32.totalorder %s27, %s28
    %p42 = scmp.eq.s32.totalorder %s20, 1
    %p43 = por %p41, %p42
    %p45 = scmp.ne.s32.totalorder %s28, %s44
    %p46 = scmp.eq.s32.totalorder %s20, 0
    %p47 = por %p45, %p46
    %s49 = sadd.s32 %s48, 1
    %p52 = scmp.eq.s32.totalorder %s14, 1
    %p53 = scmp.ne.s32.totalorder %s48, %s50
    %p54 = scmp.eq.s32.totalorder %s14, 0
    %p55 = por %p53, %p54
    %p56 = scmp.ne.s32.totalorder %s48, %s50
    %p57 = scmp.eq.s32.totalorder %s19, 1
    %p58 = por %p56, %p57
    %p59 = scmp.ne.s32.totalorder %s50, %s51
    %p60 = scmp.eq.s32.totalorder %s19, 0
    %p61 = por %p59, %p60
    %p62 = scmp.ne.s32.totalorder %s50, %s51
    %p63 = scmp.eq.s32.totalorder %s20, 1
    %p64 = por %p62, %p63
    %p66 = scmp.ne.s32.totalorder %s51, %s65
    %p67 = scmp.eq.s32.totalorder %s20, 0
    %p68 = por %p66, %p67
    %s70 = sadd.s32 %s69, 1
    %p73 = scmp.eq.s32.totalorder %s14, 1
    %p74 = scmp.ne.s32.totalorder %s69, %s71
    %p75 = scmp.eq.s32.totalorder %s14, 0
    %p76 = por %p74, %p75
    %p77 = scmp.ne.s32.totalorder %s69, %s71
    %p78 = scmp.eq.s32.totalorder %s19, 1
    %p79 = por %p77, %p78
    %p80 = scmp.ne.s32.totalorder %s71, %s72
    %p81 = scmp.eq.s32.totalorder %s19, 0
    %p82 = por %p80, %p81
    %p83 = scmp.ne.s32.totalorder %s71, %s72
    %p84 = scmp.eq.s32.totalorder %s20, 1
    %p85 = por %p83, %p84
    %p87 = scmp.ne.s32.totalorder %s72, %s86
    %p88 = scmp.eq.s32.totalorder %s20, 0
    %p89 = por %p87, %p88
    %s91 = sadd.s32 %s90, 1
    %p94 = scmp.eq.s32.totalorder %s14, 1
    %p95 = scmp.ne.s32.totalorder %s90, %s92
    %p96 = scmp.eq.s32.totalorder %s14, 0
    %p97 = por %p95, %p96
    %p98 = scmp.ne.s32.totalorder %s90, %s92
    %p99 = scmp.eq.s32.totalorder %s19, 1
    %p100 = por %p98, %p99
    %p101 = scmp.ne.s32.totalorder %s92, %s93
    %p102 = scmp.eq.s32.totalorder %s19, 0
    %p103 = por %p101, %p102
    %p104 = scmp.ne.s32.totalorder %s92, %s93
    %p105 = scmp.eq.s32.totalorder %s20, 1
    %p106 = por %p104, %p105
    %p108 = scmp.ne.s32.totalorder %s93, %s107
    %p109 = scmp.eq.s32.totalorder %s20, 0
    %p110 = por %p108, %p109
    %s112 = sadd.s32 %s111, 1
    %p115 = scmp.eq.s32.totalorder %s14, 1
    %p116 = scmp.ne.s32.totalorder %s111, %s113
    %p117 = scmp.eq.s32.totalorder %s14, 0
    %p118 = por %p116, %p117
    %p119 = scmp.ne.s32.totalorder %s111, %s113
    %p120 = scmp.eq.s32.totalorder %s19, 1
    %p121 = por %p119, %p120
    %p122 = scmp.ne.s32.totalorder %s113, %s114
    %p123 = scmp.eq.s32.totalorder %s19, 0
    %p124 = por %p122, %p123
    %p125 = scmp.ne.s32.totalorder %s113, %s114
    %p126 = scmp.eq.s32.totalorder %s20, 1
    %p127 = por %p125, %p126
    %p129 = scmp.ne.s32.totalorder %s114, %s128
    %p130 = scmp.eq.s32.totalorder %s20, 0
    %p131 = por %p129, %p130
    %s133 = sadd.s32 %s132, 1
    %p136 = scmp.eq.s32.totalorder %s14, 1
    %p137 = scmp.ne.s32.totalorder %s132, %s134
    %p138 = scmp.eq.s32.totalorder %s14, 0
    %p139 = por %p137, %p138
    %p140 = scmp.ne.s32.totalorder %s132, %s134
    %p141 = scmp.eq.s32.totalorder %s19, 1
    %p142 = por %p140, %p141
    %p143 = scmp.ne.s32.totalorder %s134, %s135
    %p144 = scmp.eq.s32.totalorder %s19, 0
    %p145 = por %p143, %p144
    %p146 = scmp.ne.s32.totalorder %s134, %s135
    %p147 = scmp.eq.s32.totalorder %s20, 1
    %p148 = por %p146, %p147
    %p150 = scmp.ne.s32.totalorder %s135, %s149
    %p151 = scmp.eq.s32.totalorder %s20, 0
    %p152 = por %p150, %p151
    %s154 = sadd.s32 %s153, 1
    %p157 = scmp.eq.s32.totalorder %s14, 1
    %p158 = scmp.ne.s32.totalorder %s153, %s155
    %p159 = scmp.eq.s32.totalorder %s14, 0
    %p160 = por %p158, %p159
    %p161 = scmp.ne.s32.totalorder %s153, %s155
    %p162 = scmp.eq.s32.totalorder %s19, 1
    %p163 = por %p161, %p162
    %p164 = scmp.ne.s32.totalorder %s155, %s156
    %p165 = scmp.eq.s32.totalorder %s19, 0
    %p166 = por %p164, %p165
    %p167 = scmp.ne.s32.totalorder %s155, %s156
    %p168 = scmp.eq.s32.totalorder %s20, 1
    %p169 = por %p167, %p168
    %p171 = scmp.ne.s32.totalorder %s156, %s170
    %p172 = scmp.eq.s32.totalorder %s20, 0
    %p173 = por %p171, %p172
    %s174 = ssub.s32 %s14, %s21
    %p175 = scmp.eq.s32.totalorder %s174, 0
    %s177 = sadd.s32 %s176, 1
    %s178 = scalar_select %p175, %s176, %s177
    %p181 = pneg %p175
    %p182 = scmp.eq.s32.totalorder %s14, 1
    %p183 = por %p181, %p182
    %p184 = scmp.ne.s32.totalorder %s176, %s179
    %p185 = scmp.eq.s32.totalorder %s14, 0
    %p186 = por %p184, %p185
    %p187 = scmp.ne.s32.totalorder %s176, %s179
    %p188 = scmp.eq.s32.totalorder %s19, 1
    %p189 = por %p187, %p188
    %p190 = scmp.ne.s32.totalorder %s179, %s180
    %p191 = scmp.eq.s32.totalorder %s19, 0
    %p192 = por %p190, %p191
    %p193 = scmp.ne.s32.totalorder %s179, %s180
    %p194 = scmp.eq.s32.totalorder %s20, 1
    %p195 = por %p193, %p194
    %p197 = scmp.ne.s32.totalorder %s180, %s196
    %p198 = scmp.eq.s32.totalorder %s20, 0
    %p199 = por %p197, %p198
    %p200 = scmp.le.s32.totalorder 1, %s14
    %p201 = scmp.lt.s32.totalorder %s14, 3
    %p202 = pnand %p200, %p201
    %p203 = pneg %p202
    // Predicated region
    $region9: #{tpu_custom_call.1} parent=5 // pred_check
      _
    $region10: #{tpu_custom_call.1} parent=5 // pred_check_branch
      %205 = sbr.rel (%p202) target = $region12
    $region11: #{tpu_custom_call.1} parent=5 // pred_region
      %s206 = ssub.s32 %s14, 1
      // Predicated region
      $region13: #{tpu_custom_call.1} parent=11 // pred_check
        %p207 = pneg %p61
      $region14: #{tpu_custom_call.1} parent=11 // pred_check_branch
        %209 = sbr.rel (%p207) target = $region16
      $region15: #{tpu_custom_call.1} parent=11 // pred_region
        _
      $region16: #{tpu_custom_call.1} parent=11 // pred_fallthru
        _
      // Predicated region
      $region17: #{tpu_custom_call.1} parent=11 // pred_check
        %p210 = pneg %p82
      $region18: #{tpu_custom_call.1} parent=11 // pred_check_branch
        %212 = sbr.rel (%p210) target = $region20
      $region19: #{tpu_custom_call.1} parent=11 // pred_region
        _
      $region20: #{tpu_custom_call.1} parent=11 // pred_fallthru
        _
      // Predicated region
      $region21: #{tpu_custom_call.1} parent=11 // pred_check
        %p213 = pneg %p103
      $region22: #{tpu_custom_call.1} parent=11 // pred_check_branch
        %215 = sbr.rel (%p213) target = $region24
      $region23: #{tpu_custom_call.1} parent=11 // pred_region
        _
      $region24: #{tpu_custom_call.1} parent=11 // pred_fallthru
        _
      // Predicated region
      $region25: #{tpu_custom_call.1} parent=11 // pred_check
        %p216 = pneg %p124
      $region26: #{tpu_custom_call.1} parent=11 // pred_check_branch
        %218 = sbr.rel (%p216) target = $region28
      $region27: #{tpu_custom_call.1} parent=11 // pred_region
        _
      $region28: #{tpu_custom_call.1} parent=11 // pred_fallthru
        _
      // Predicated region
      $region29: #{tpu_custom_call.1} parent=11 // pred_check
        %p219 = pneg %p145
      $region30: #{tpu_custom_call.1} parent=11 // pred_check_branch
        %221 = sbr.rel (%p219) target = $region32
      $region31: #{tpu_custom_call.1} parent=11 // pred_region
        _
      $region32: #{tpu_custom_call.1} parent=11 // pred_fallthru
        _
      // Predicated region
      $region33: #{tpu_custom_call.1} parent=11 // pred_check
        %p222 = pneg %p166
      $region34: #{tpu_custom_call.1} parent=11 // pred_check_branch
        %224 = sbr.rel (%p222) target = $region36
      $region35: #{tpu_custom_call.1} parent=11 // pred_region
        _
      $region36: #{tpu_custom_call.1} parent=11 // pred_fallthru
        _
    $region12: #{tpu_custom_call.1} parent=5 // pred_fallthru
      _
    %p225 = scmp.lt.s32.totalorder %s14, 2
    // Predicated region
    $region37: #{tpu_custom_call.1} parent=5 // pred_check
      %p226 = pneg %p225
    $region38: #{tpu_custom_call.1} parent=5 // pred_check_branch
      %228 = sbr.rel (%p226) target = $region40
    $region39: #{tpu_custom_call.1} parent=5 // pred_region
      // Predicated region
      $region41: #{tpu_custom_call.1} parent=39 // pred_check
        %p229 = pneg %p34
      $region42: #{tpu_custom_call.1} parent=39 // pred_check_branch
        %231 = sbr.rel (%p229) target = $region44
      $region43: #{tpu_custom_call.1} parent=39 // pred_region
        %p232 = scmp.lt.s32.totalorder %s14, 1
        %s233 = scalar_select %p232, %s14, 1
        %s234 = smul.addr %s233, 4
        %s235 = scalar_lea.vmem %s0, %s234
      $region44: #{tpu_custom_call.1} parent=39 // pred_fallthru
        _
    $region40: #{tpu_custom_call.1} parent=5 // pred_fallthru
      _
    %p236 = scmp.le.s32.totalorder 1, %s14
    %p237 = scmp.lt.s32.totalorder %s14, 3
    %p238 = pnand %p236, %p237
    %p239 = pneg %p238
    // Predicated region
    $region45: #{tpu_custom_call.1} parent=5 // pred_check
      _
    $region46: #{tpu_custom_call.1} parent=5 // pred_check_branch
      %241 = sbr.rel (%p238) target = $region48
    $region47: #{tpu_custom_call.1} parent=5 // pred_region
      %s242 = ssub.s32 %s14, 1
      %p243 = scmp.lt.s32.totalorder %s19, 1
      %s244 = scalar_select %p243, %s19, 1
      %s245 = smul.addr %s244, 4
      %s246 = scalar_lea.vmem %s0, %s245
      %p247 = pneg %p40
      %p248 = pneg %p37
      %p249 = pneg %p61
      %p250 = pneg %p58
      %p251 = pneg %p82
      %p252 = pneg %p79
      %p253 = pneg %p103
      %p254 = pneg %p100
      %p255 = pneg %p124
      %p256 = pneg %p121
      %p257 = pneg %p145
      %p258 = pneg %p142
      %p259 = pneg %p166
      %p260 = pneg %p163
      %p261 = pneg %p192
      %p262 = pneg %p189
      %p263 = scmp.lt.s32.totalorder %s19, 1
      %s264 = scalar_select %p263, %s19, 1
      %s265 = smul.addr %s264, 8
      %s266 = scalar_lea.vmem %s7, %s265
      %p267 = scmp.lt.s32.totalorder %s19, 1
      %s268 = scalar_select %p267, %s19, 1
      %s269 = smul.addr %s268, 4
      %s270 = scalar_lea.vmem %s0, %s269
      %p271 = scmp.lt.s32.totalorder %s19, 1
      %s272 = scalar_select %p271, %s19, 1
      %s273 = smul.addr %s272, 8
      %s274 = scalar_lea.vmem %s7, %s273
      %v276 = vld [vmem:[%s270] sm:$0xf]
      %v277 = vld [vmem:[%s1] sm:$0xf]
      %v278 = vld [vmem:[%s1 + $0x4] sm:$0xf]
      %v279 = vld [vmem:[%s1 + $0x8] sm:$0xf]
      %v280 = vld [vmem:[%s1 + $0xc] sm:$0xf]
      %v281 = vld [vmem:[%s1 + $0x10] sm:$0xf]
      %v282 = vld [vmem:[%s1 + $0x14] sm:$0xf]
      %v283 = vld [vmem:[%s1 + $0x18] sm:$0xf]
      %v284 = vld [vmem:[%s1 + $0x1c] sm:$0xf]
      %v285 = vld [vmem:[%s2] sm:$0x1]
      %v287 = vlaneseq
      %v288 = vshrl.u32 %v287, 7
      %v289 = vsub.s32 0, %v288
      %v290 = vrot.slane %v285, %v289
      %v300 = vunpack.c.l.b16 %v277
      %v301 = vunpack.c.l.b16 %v278
      %v302 = vunpack.c.l.b16 %v279
      %v303 = vunpack.c.l.b16 %v280
      %v304 = vunpack.c.l.b16 %v281
      %v305 = vunpack.c.l.b16 %v282
      %v306 = vunpack.c.l.b16 %v283
      %v307 = vunpack.c.l.b16 %v284
      %v308 = vpack.c.b16 %v301, %v300
      %v309 = vpack.c.b16 %v303, %v302
      %v310 = vpack.c.b16 %v305, %v304
      %v311 = vpack.c.b16 %v307, %v306
      %vm316 = vcmask 523264
      %v318 = vsel %vm316, %v276, 0
      %320 = vmatprep.subr.bf16.mxu0 0
      %321 = vmatpush1.bf16.msra.mxu0 %v308
      %322 = vmatprep.subr.bf16.mxu0 0
      %323 = vmatpush1.bf16.msra.mxu0 %v309
      %324 = vmatprep.subr.bf16.mxu0 0
      %325 = vmatpush1.bf16.msra.mxu0 %v310
      %326 = vmatprep.subr.bf16.mxu0 0
      %327 = vmatpush1.bf16.msra.mxu0 %v311
      %328 = vmatprep.subr.bf16.mxu0 0
      %329 = vmatpush1.bf16.msra.mxu0 0
      %330 = vmatprep.subr.bf16.mxu0 0
      %331 = vmatpush1.bf16.msra.mxu0 0
      %332 = vmatprep.subr.bf16.mxu0 0
      %333 = vmatpush1.bf16.msra.mxu0 0
      %334 = vmatprep.subr.bf16.mxu0 0
      %335 = vmatpush1.bf16.msra.mxu0 0
      %336 = vmatprep.subr.bf16.mxu0 0
      %337 = vmatpush1.bf16.msra.mxu0 0
      %338 = vmatprep.subr.bf16.mxu0 0
      %339 = vmatpush1.bf16.msra.mxu0 0
      %340 = vmatprep.subr.bf16.mxu0 0
      %341 = vmatpush1.bf16.msra.mxu0 0
      %342 = vmatprep.subr.bf16.mxu0 0
      %343 = vmatpush1.bf16.msra.mxu0 0
      %344 = vmatprep.subr.bf16.mxu0 0
      %345 = vmatpush1.bf16.msra.mxu0 0
      %346 = vmatprep.subr.bf16.mxu0 0
      %347 = vmatpush1.bf16.msra.mxu0 0
      %348 = vmatprep.subr.bf16.mxu0 0
      %349 = vmatpush1.bf16.msra.mxu0 0
      %350 = vmatprep.subr.bf16.mxu0 0
      %351 = vmatpush1.bf16.msra.mxu0 0
      %352 = vmatprep.mubr.bf16.mxu0 0
      %353 = vmatmul.mubr.bf16.gmra.mrb[0].mxu0 %v318
      %v354 = vpop.f32.mrb[0].mxu0
      %v355 = vadd.f32 %v290, %v354
      %v356 = vpop.f32.mrb[0].mxu0
      %v357 = vpop.f32.mrb[0].mxu0
      %v358 = vpop.f32.mrb[0].mxu0
      %359 = vdwg.mxu0
      %v360 = vmax.f32 %v355, 0.0
      %v361 = vpack.c.bf16 %v360, %v360
      %v362 = vld [vmem:[%s3] sm:$0xf]
      %v363 = vld [vmem:[%s3 + $0x4] sm:$0xf]
      %v364 = vld [vmem:[%s3 + $0x8] sm:$0xf]
      %v365 = vld [vmem:[%s3 + $0xc] sm:$0xf]
      %v366 = vld [vmem:[%s4] sm:$0x1]
      %v368 = vlaneseq
      %v369 = vshrl.u32 %v368, 7
      %v370 = vsub.s32 0, %v369
      %v371 = vrot.slane %v366, %v370
      %v377 = vunpack.c.l.b16 %v362
      %v378 = vunpack.c.l.b16 %v363
      %v379 = vunpack.c.l.b16 %v364
      %v380 = vunpack.c.l.b16 %v365
      %v381 = vpack.c.b16 %v378, %v377
      %v382 = vpack.c.b16 %v380, %v379
      %vm385 = vcmask 261120
      %v387 = vsel %vm385, %v361, 0
      %389 = vmatprep.subr.bf16.mxu0 0
      %390 = vmatpush1.bf16.msra.mxu0 %v381
      %391 = vmatprep.subr.bf16.mxu0 0
      %392 = vmatpush1.bf16.msra.mxu0 %v382
      %393 = vmatprep.subr.bf16.mxu0 0
      %394 = vmatpush1.bf16.msra.mxu0 0
      %395 = vmatprep.subr.bf16.mxu0 0
      %396 = vmatpush1.bf16.msra.mxu0 0
      %397 = vmatprep.subr.bf16.mxu0 0
      %398 = vmatpush1.bf16.msra.mxu0 0
      %399 = vmatprep.subr.bf16.mxu0 0
      %400 = vmatpush1.bf16.msra.mxu0 0
      %401 = vmatprep.subr.bf16.mxu0 0
      %402 = vmatpush1.bf16.msra.mxu0 0
      %403 = vmatprep.subr.bf16.mxu0 0
      %404 = vmatpush1.bf16.msra.mxu0 0
      %405 = vmatprep.subr.bf16.mxu0 0
      %406 = vmatpush1.bf16.msra.mxu0 0
      %407 = vmatprep.subr.bf16.mxu0 0
      %408 = vmatpush1.bf16.msra.mxu0 0
      %409 = vmatprep.subr.bf16.mxu0 0
      %410 = vmatpush1.bf16.msra.mxu0 0
      %411 = vmatprep.subr.bf16.mxu0 0
      %412 = vmatpush1.bf16.msra.mxu0 0
      %413 = vmatprep.subr.bf16.mxu0 0
      %414 = vmatpush1.bf16.msra.mxu0 0
      %415 = vmatprep.subr.bf16.mxu0 0
      %416 = vmatpush1.bf16.msra.mxu0 0
      %417 = vmatprep.subr.bf16.mxu0 0
      %418 = vmatpush1.bf16.msra.mxu0 0
      %419 = vmatprep.subr.bf16.mxu0 0
      %420 = vmatpush1.bf16.msra.mxu0 0
      %421 = vmatprep.mubr.bf16.mxu0 0
      %422 = vmatmul.mubr.bf16.gmra.mrb[0].mxu0 %v387
      %v423 = vpop.f32.mrb[0].mxu0
      %v424 = vadd.f32 %v371, %v423
      %v425 = vpop.f32.mrb[0].mxu0
      %v426 = vpop.f32.mrb[0].mxu0
      %v427 = vpop.f32.mrb[0].mxu0
      %428 = vdwg.mxu0
      %v429 = vmax.f32 %v424, 0.0
      %v430 = vld [vmem:[%s5] sm:$0x1]
      %v432 = vlaneseq
      %v433 = vshrl.u32 %v432, 7
      %v434 = vsub.s32 0, %v433
      %v435 = vrot.slane %v430, %v434
      %v437 = vmul.f32 %v429, %v435
      %v438 = vsel %vm385, %v437, 0.0
      %439 = vadd.xlane.f32.xlu0 %v438
      %v440 = vpop.xlane.xlu0 %439
      %s441 = sld [smem:[#allocation2]]
      %v442 = vstv %s441
      %v443 = vadd.f32 %v440, %v442
      %v444 = vsub.f32 0.0, %v443
      %v445 = vmul.f32 %v444, 1.442695
      %v446 = vpow.pop %v445
      %v447 = vadd.f32 %v446, 1.0
      %v448 = vrcp.pop %v447
      %vm449 = vcmask 7168
      %450 = vst.msk [vmem:[%s274] sm:$0xff] %vm449, %v448
      %p451 = scmp.lt.s32.totalorder %s19, 1
      %s452 = scalar_select %p451, %s19, 1
      %s453 = smul.addr %s452, 8
      %s454 = scalar_lea.vmem %s7, %s453
      // Predicated region
      $region49: #{tpu_custom_call.1} parent=47 // pred_check
        %p455 = pneg %p189
      $region50: #{tpu_custom_call.1} parent=47 // pred_check_branch
        %457 = sbr.rel (%p455) target = $region52
      $region51: #{tpu_custom_call.1} parent=47 // pred_region
        _
      $region52: #{tpu_custom_call.1} parent=47 // pred_fallthru
        _
    $region48: #{tpu_custom_call.1} parent=5 // pred_fallthru
      _
    %p458 = scmp.le.s32.totalorder 2, %s14
    // Predicated region
    $region53: #{tpu_custom_call.1} parent=5 // pred_check
      %p459 = pneg %p458
    $region54: #{tpu_custom_call.1} parent=5 // pred_check_branch
      %461 = sbr.rel (%p459) target = $region56
    $region55: #{tpu_custom_call.1} parent=5 // pred_region
      %s462 = ssub.s32 %s14, 2
      // Predicated region
      $region57: #{tpu_custom_call.1} parent=55 // pred_check
        %p463 = pneg %p195
      $region58: #{tpu_custom_call.1} parent=55 // pred_check_branch
        %465 = sbr.rel (%p463) target = $region60
      $region59: #{tpu_custom_call.1} parent=55 // pred_region
        %p466 = scmp.lt.s32.totalorder %s20, 1
        %s467 = scalar_select %p466, %s20, 1
        %s468 = smul.addr %s467, 8
        %s469 = scalar_lea.vmem %s7, %s468
      $region60: #{tpu_custom_call.1} parent=55 // pred_fallthru
        _
    $region56: #{tpu_custom_call.1} parent=5 // pred_fallthru
      _
  $region6: #{tpu_custom_call.1} parent=0 // loop_footer
    %s18 = sadd.s32 1, %s14
  $region7: #{tpu_custom_call.1} parent=0 // loop_footer_branch
    %13 = sbr.rel target = $region3
  $region8: #{tpu_custom_call.1} parent=0 // loop_exit
    _

</llo_original>
